<compile_context>
chip_gen: v5e
topology: v5e:2x2
jax: 0.10.0
libtpu: 0.0.40
codegen_flags: <defaults>
</compile_context>

<pallas_src>
import functools

import jax
import jax.numpy as jnp
from jax.experimental import pallas as pl
from jax.experimental.pallas import tpu as pltpu


def _round_up(v, m):
    return ((v + m - 1) // m) * m


_MEGACORE_CACHE = []
_BUFFERED_WEIGHTS_OK = [True]   # flipped off if this build rejects pl.Buffered(1)


def _is_megacore_chip():
    """True for chips with >1 TensorCore per device (v4 / v5p / v7x)."""
    if not _MEGACORE_CACHE:
        try:
            kind = jax.devices()[0].device_kind.lower()
        except Exception:
            kind = ""
        _MEGACORE_CACHE.append(any(t in kind for t in ("v4", "v5p", "v7")))
    return _MEGACORE_CACHE[0]


# ----------------------------------------------------------------------------
# Kernel 1: BatchNorm1d statistics -> folded per-feature scale/shift.
# Streaming Welford/Chan combine over large row tiles; ragged tail masked.
# ----------------------------------------------------------------------------
def _bn_stats_kernel(x_ref, gamma_ref, beta_ref, scale_ref, shift_ref,
                     mean_ref, ssq_ref, *, n_rows, eps):
    i = pl.program_id(0)
    ts = x_ref.shape[0]

    @pl.when(i == 0)
    def _init():
        mean_ref[...] = jnp.zeros_like(mean_ref)
        ssq_ref[...] = jnp.zeros_like(ssq_ref)

    row0 = i * ts
    rows = jax.lax.broadcasted_iota(jnp.int32, (ts, 1), 0) + row0
    valid = rows < n_rows
    x = jnp.where(valid, x_ref[...].astype(jnp.float32), 0.0)

    c_t = jnp.minimum(n_rows - row0, ts).astype(jnp.float32)   # valid rows here (>=1)
    c_prev = row0.astype(jnp.float32)                          # rows already folded in
    tot = c_prev + c_t
    m_t = jnp.sum(x, axis=0, keepdims=True) / c_t
    d = jnp.where(valid, x - m_t, 0.0)
    ssq_t = jnp.sum(d * d, axis=0, keepdims=True)
    delta = m_t - mean_ref[...]
    mean_ref[...] = mean_ref[...] + delta * (c_t / tot)
    ssq_ref[...] = ssq_ref[...] + ssq_t + delta * delta * (c_prev * c_t / tot)

    @pl.when(i == pl.num_programs(0) - 1)
    def _finalize():
        var = ssq_ref[...] * (1.0 / n_rows)           # biased variance (training BN)
        inv_std = jax.lax.rsqrt(var + eps)
        scale = gamma_ref[...].astype(jnp.float32) * inv_std
        scale_ref[...] = scale
        shift_ref[...] = beta_ref[...].astype(jnp.float32) - mean_ref[...] * scale


# ----------------------------------------------------------------------------
# Kernel 2: fused (BN-folded) Linear/ReLU stack + both heads + mean pooling.
# Head weights are one lane-dense [W2 | W1 | count] matmul; node head stores
# only the out2 columns; pooling is a one-pass MXU segment sum.
# ----------------------------------------------------------------------------
def _fused_mlp_kernel(x_ref, batch_ref, *args, num_hidden, num_graphs_pad,
                      n_rows, out2, accumulate_pool):
    node_ref, pool_ref = args[-2], args[-1]
    wb = args[:-2]                       # w0, b0, ..., w_head, b_head (biases f32)
    tm = x_ref.shape[0]
    row0 = pl.program_id(0) * tm

    h = x_ref[...].astype(jnp.float32)   # BN affine already folded into layer 0
    for li in range(num_hidden):
        w = wb[2 * li][...]
        b = wb[2 * li + 1][...]
        h = jnp.dot(h.astype(w.dtype), w, preferred_element_type=jnp.float32)
        h = jnp.maximum(h + b, 0.0)

    w_hd = wb[2 * num_hidden][...]
    b_hd = wb[2 * num_hidden + 1][...]
    y = jnp.dot(h.astype(w_hd.dtype), w_hd,
                preferred_element_type=jnp.float32) + b_hd      # (tm, out_pad)

    # Node head: only out2 columns are consumed downstream -> narrow HBM write.
    node_ref[...] = y[:, :out2].astype(node_ref.dtype)

    # Mask rows past the true end of X (ragged last tile reads unspecified data)
    # before the pooling matmul so garbage cannot leak into the segment sums.
    rows = jax.lax.broadcasted_iota(jnp.int32, (tm, 1), 0) + row0
    y_pool = jnp.where(rows < n_rows, y, 0.0)
    gids = jax.lax.broadcasted_iota(jnp.int32, (num_graphs_pad, tm), 0)
    onehot = (batch_ref[...] == gids).astype(jnp.float32)       # (g_pad, tm)
    pool_tile = jnp.dot(onehot, y_pool, preferred_element_type=jnp.float32)

    if accumulate_pool:
        @pl.when(pl.program_id(0) == 0)
        def _zero():
            pool_ref[...] = jnp.zeros_like(pool_ref)
        pool_ref[...] += pool_tile
    else:
        pool_ref[...] = pool_tile


# ----------------------------------------------------------------------------
# Parameter construction (mirrors MLP_multihead.__init__, deterministic).
# ----------------------------------------------------------------------------
def init_params(key, input_dim, hidden_dim, output_dim1, output_dim2,
                num_layers, dtype=jnp.float32):
    if num_layers == 1:
        dims = [(input_dim, output_dim1), (input_dim, output_dim2)]
    else:
        dims = [(input_dim, hidden_dim)]
        dims += [(hidden_dim, hidden_dim)] * (num_layers - 2)
        dims += [(hidden_dim, output_dim1), (hidden_dim, output_dim2)]

    layers = []
    for (din, dout) in dims:
        key, kw, kb = jax.random.split(key, 3)
        # PyTorch stores weight as (out, in); we keep (in, out) so the kernel
        # computes x @ W directly on the MXU.
        w = (jax.random.normal(kw, (din, dout), jnp.float32) *
             (1.0 / jnp.sqrt(din))).astype(dtype)
        b = (jax.random.normal(kb, (1, dout), jnp.float32) * 0.01).astype(dtype)
        layers.append((w, b))

    return {
        "bn_gamma": jnp.ones((1, input_dim), jnp.float32),
        "bn_beta": jnp.zeros((1, input_dim), jnp.float32),
        "layers": layers,
    }


# ----------------------------------------------------------------------------
# Forward pass.
# ----------------------------------------------------------------------------
def mlp_multihead_forward(params, x, batch, num_graphs, *, tile_rows=1024,
                          pool_partials=None):
    n, d_in = x.shape
    layers = params["layers"]
    num_hidden = len(layers) - 2
    w1, b1 = layers[-2]                  # pooled head (output_dim1)
    w2, b2 = layers[-1]                  # per-node head (output_dim2)
    out1, out2 = w1.shape[1], w2.shape[1]
    d_last = w1.shape[0]
    wdtype = w1.dtype

    if pool_partials is None:            # per-tile partials only pay off with 2 TCs
        pool_partials = _is_megacore_chip()

    sub = 16 if x.dtype == jnp.bfloat16 else 8

    # ------------------- Pass 1: BatchNorm batch statistics -------------------
    bytes_per_row = d_in * x.dtype.itemsize
    ts = max(sub, ((2 << 20) // max(bytes_per_row, 1)) // sub * sub)  # ~2 MB / step
    ts = min(ts, _round_up(n, sub))
    stats_tiles = pl.cdiv(n, ts)

    scale, shift = pl.pallas_call(
        functools.partial(_bn_stats_kernel, n_rows=n, eps=1e-5),
        out_shape=(jax.ShapeDtypeStruct((1, d_in), jnp.float32),
                   jax.ShapeDtypeStruct((1, d_in), jnp.float32)),
        grid_spec=pltpu.PrefetchScalarGridSpec(
            num_scalar_prefetch=0,
            grid=(stats_tiles,),
            in_specs=[pl.BlockSpec((ts, d_in), lambda i: (i, 0)),
                      pl.BlockSpec((1, d_in), lambda i: (0, 0)),
                      pl.BlockSpec((1, d_in), lambda i: (0, 0))],
            out_specs=[pl.BlockSpec((1, d_in), lambda i: (0, 0)),
                       pl.BlockSpec((1, d_in), lambda i: (0, 0))],
            scratch_shapes=[pltpu.VMEM((1, d_in), jnp.float32),
                            pltpu.VMEM((1, d_in), jnp.float32)]),
        compiler_params=pltpu.CompilerParams(
            dimension_semantics=("arbitrary",)),
    )(x, params["bn_gamma"], params["bn_beta"])

    # ----- Fold BN affine into layer 0; build fused head [W2 | W1 | count] -----
    out_pad = _round_up(out1 + out2 + 1, 128)
    count_col = out1 + out2
    w_head32 = jnp.zeros((d_last, out_pad), jnp.float32)
    w_head32 = w_head32.at[:, :out2].set(w2.astype(jnp.float32))
    w_head32 = w_head32.at[:, out2:out2 + out1].set(w1.astype(jnp.float32))
    b_head = jnp.zeros((1, out_pad), jnp.float32)
    b_head = b_head.at[:, :out2].set(b2.astype(jnp.float32).reshape(1, -1))
    b_head = b_head.at[:, out2:out2 + out1].set(b1.astype(jnp.float32).reshape(1, -1))
    b_head = b_head.at[:, count_col].set(1.0)      # pooled column == node counts

    resident = []                                   # (w, b) pairs; biases in f32
    if num_hidden > 0:
        w0, b0 = layers[0]
        w0f = (scale.reshape(-1, 1) * w0.astype(jnp.float32)).astype(wdtype)
        b0f = b0.astype(jnp.float32).reshape(1, -1) + shift @ w0.astype(jnp.float32)
        resident += [w0f, b0f]
        for li in range(1, num_hidden):
            w, b = layers[li]
            resident += [w, b.astype(jnp.float32).reshape(1, -1)]
        w_head = w_head32.astype(wdtype)
    else:
        # num_layers == 1: both heads act directly on the BN'd input.
        b_head = b_head + shift @ w_head32
        w_head = (scale.reshape(-1, 1) * w_head32).astype(wdtype)
    resident += [w_head, b_head]

    # ------------- Pass 2: fused MLP + both heads + mean pooling -------------
    if n <= tile_rows:
        tm = _round_up(max(n, 1), sub)
    else:
        tm = _round_up(tile_rows, 128)
    num_tiles = pl.cdiv(n, tm)
    n_pad = num_tiles * tm
    g_pad = _round_up(max(num_graphs, 1), 8)

    # Only the tiny batch-id row vector is padded (layout: last block dim must be
    # a multiple of 128 or the full extent).  X itself streams un-padded.
    batch_pad = jnp.pad(batch.astype(jnp.int32), (0, n_pad - n),
                        constant_values=-1).reshape(1, n_pad)

    x_spec = pl.BlockSpec((tm, d_in), lambda i: (i, 0))
    batch_spec = pl.BlockSpec((1, tm), lambda i: (0, i))
    node_spec = pl.BlockSpec((tm, out2), lambda i: (i, 0))
    if pool_partials:
        pool_shape = jax.ShapeDtypeStruct((num_tiles, g_pad, out_pad), jnp.float32)
        pool_spec = pl.BlockSpec((None, g_pad, out_pad), lambda i: (i, 0, 0))
        semantics = ("parallel",)
    else:
        pool_shape = jax.ShapeDtypeStruct((g_pad, out_pad), jnp.float32)
        pool_spec = pl.BlockSpec((g_pad, out_pad), lambda i: (0, 0))
        semantics = ("arbitrary",)

    def _vmem_limit(nbuf_weights):
        res = sum(int(a.size) * a.dtype.itemsize for a in resident) * nbuf_weights
        stream = 2 * (tm * d_in * x.dtype.itemsize          # x tile
                      + tm * out2 * x.dtype.itemsize        # node tile
                      + tm * 4)                             # batch tile
        pool = 2 * g_pad * out_pad * 4
        max_width = max(w.shape[1] for w in resident[0::2])
        act = 4 * tm * max_width * 4                         # f32 activation headroom
        need = int(1.5 * (res + stream + pool + act)) + (8 << 20)
        return max(32 << 20, min(need, 96 << 20))

    def _run(use_buffered):
        nbuf = 1 if use_buffered else 2
        const_specs = []
        for a in resident:
            nd = len(a.shape)
            idx = (lambda nd_: (lambda i: (0,) * nd_))(nd)
            if use_buffered:
                # Constant-index blocks are never re-fetched; one VMEM buffer
                # halves resident-weight footprint (matters most on v7x 64 MiB).
                const_specs.append(
                    pl.BlockSpec(a.shape, idx, pipeline_mode=pl.Buffered(1)))
            else:
                const_specs.append(pl.BlockSpec(a.shape, idx))
        return pl.pallas_call(
            functools.partial(_fused_mlp_kernel, num_hidden=num_hidden,
                              num_graphs_pad=g_pad, n_rows=n, out2=out2,
                              accumulate_pool=not pool_partials),
            out_shape=(jax.ShapeDtypeStruct((n, out2), x.dtype), pool_shape),
            grid_spec=pltpu.PrefetchScalarGridSpec(
                num_scalar_prefetch=0,
                grid=(num_tiles,),
                in_specs=[x_spec, batch_spec] + const_specs,
                out_specs=[node_spec, pool_spec]),
            compiler_params=pltpu.CompilerParams(
                dimension_semantics=semantics,
                vmem_limit_bytes=_vmem_limit(nbuf)),
        )(x, batch_pad, *resident)

    try:
        node_out, pool_out = _run(_BUFFERED_WEIGHTS_OK[0])
    except Exception:
        if not _BUFFERED_WEIGHTS_OK[0]:
            raise
        _BUFFERED_WEIGHTS_OK[0] = False          # this build rejects Buffered(1)
        node_out, pool_out = _run(False)

    # Tiny epilogue: combine partials (megacore path), normalize, split heads.
    pooled = jnp.sum(pool_out, axis=0) if pool_partials else pool_out
    counts = pooled[:num_graphs, count_col:count_col + 1]
    # Empty graphs -> 0 (scatter-mean behavior), not NaN.
    head1 = (pooled[:num_graphs, out2:out2 + out1]
             / jnp.maximum(counts, 1.0)).astype(x.dtype)
    head2 = node_out                              # (N, out2)
    return head1, head2


# ----------------------------------------------------------------------------
# Pure-JAX reference for correctness checks.
# ----------------------------------------------------------------------------
def mlp_multihead_reference(params, x, batch, num_graphs):
    xf = x.astype(jnp.float32)
    mean = jnp.mean(xf, axis=0, keepdims=True)
    var = jnp.mean((xf - mean) ** 2, axis=0, keepdims=True)
    xf = (xf - mean) / jnp.sqrt(var + 1e-5)
    xf = xf * params["bn_gamma"] + params["bn_beta"]
    layers = params["layers"]
    for i in range(len(layers) - 2):
        w, b = layers[i]
        xf = jnp.maximum(xf @ w.astype(jnp.float32) + b.astype(jnp.float32), 0.0)
    w1, b1 = layers[-2]
    w2, b2 = layers[-1]
    h1 = xf @ w1.astype(jnp.float32) + b1.astype(jnp.float32)
    h2 = xf @ w2.astype(jnp.float32) + b2.astype(jnp.float32)
    onehot = (batch[:, None] == jnp.arange(num_graphs)[None, :]).astype(jnp.float32)
    counts = jnp.sum(onehot, axis=0)[:, None]
    pooled = (onehot.T @ h1) / jnp.maximum(counts, 1.0)
    return pooled, h2


# ----------------------------------------------------------------------------
if __name__ == "__main__":
    key = jax.random.PRNGKey(0)

    # --- Case 1: small single-tile, f32, auto pooling mode ---
    N, D_IN, D_H, OUT1, OUT2, NUM_LAYERS, G = 16, 32, 32, 8, 8, 3, 2
    key, kx, kp = jax.random.split(key, 3)
    x = jax.random.normal(kx, (N, D_IN), jnp.float32)
    batch = jnp.concatenate([jnp.zeros((N // 2,), jnp.int32),
                             jnp.ones((N - N // 2,), jnp.int32)])
    params = init_params(kp, D_IN, D_H, OUT1, OUT2, NUM_LAYERS)
    out_pool, out_node = jax.block_until_ready(
        mlp_multihead_forward(params, x, batch, G))
    ref_pool, ref_node = mlp_multihead_reference(params, x, batch, G)
    assert out_pool.shape == (G, OUT1) and out_node.shape == (N, OUT2)
    assert jnp.allclose(out_pool, ref_pool, atol=1e-3, rtol=1e-3)
    assert jnp.allclose(out_node, ref_node, atol=1e-3, rtol=1e-3)

    # --- Case 2: multi-tile with ragged last tile, f32, per-tile pool partials ---
    N2, D_IN2, D_H2, O1b, O2b, NL2, G2 = 300, 32, 64, 8, 4, 4, 3
    key, kx2, kp2 = jax.random.split(key, 3)
    x2 = jax.random.normal(kx2, (N2, D_IN2), jnp.float32)
    batch2 = jnp.concatenate([jnp.zeros((100,), jnp.int32),
                              jnp.ones((100,), jnp.int32),
                              jnp.full((100,), 2, jnp.int32)])
    params2 = init_params(kp2, D_IN2, D_H2, O1b, O2b, NL2)
    out_pool2, out_node2 = jax.block_until_ready(
        mlp_multihead_forward(params2, x2, batch2, G2, tile_rows=128,
                              pool_partials=True))
    ref_pool2, ref_node2 = mlp_multihead_reference(params2, x2, batch2, G2)
    assert out_pool2.shape == (G2, O1b) and out_node2.shape == (N2, O2b)
    assert jnp.allclose(out_pool2, ref_pool2, atol=1e-3, rtol=1e-3)
    assert jnp.allclose(out_node2, ref_node2, atol=1e-3, rtol=1e-3)

    # --- Case 3: bf16 weights (MXU fast path), in-VMEM pooling accumulator ---
    params3 = init_params(kp2, D_IN2, D_H2, O1b, O2b, NL2, dtype=jnp.bfloat16)
    out_pool3, out_node3 = jax.block_until_ready(
        mlp_multihead_forward(params3, x2, batch2, G2, tile_rows=128,
                              pool_partials=False))
    ref_pool3, ref_node3 = mlp_multihead_reference(params3, x2, batch2, G2)
    assert out_pool3.shape == (G2, O1b) and out_node3.shape == (N2, O2b)
    assert jnp.allclose(out_pool3, ref_pool3, atol=1e-1, rtol=5e-2)
    assert jnp.allclose(out_node3, ref_node3, atol=1e-1, rtol=5e-2)

    print("KERNEL_OK")
</pallas_src>

<mosaic_0001>
module attributes {stable_mosaic.version = 11 : i64} {
  func.func @_bn_stats_kernel(%arg0: i32, %arg1: memref<16x32xf32, #tpu.memory_space<vmem>>, %arg2: memref<1x32xf32, #tpu.memory_space<vmem>>, %arg3: memref<1x32xf32, #tpu.memory_space<vmem>>, %arg4: memref<1x32xf32, #tpu.memory_space<vmem>>, %arg5: memref<1x32xf32, #tpu.memory_space<vmem>>, %arg6: memref<1x32xf32, #tpu.memory_space<vmem>>, %arg7: memref<1x32xf32, #tpu.memory_space<vmem>>) attributes {dimension_semantics = [#tpu.dimension_semantics<arbitrary>], iteration_bounds = array<i64: 1>, scalar_prefetch = 0 : i64, scratch_operands = 2 : i64, tpu.core_type = #tpu.core_type<tc>, window_params = [{transform_indices = @transform_0, window_bounds = array<i64: 16, 32>}, {pipeline_mode = #tpu.pipeline_mode<synchronous>, transform_indices = @transform_1, window_bounds = array<i64: 1, 32>}, {pipeline_mode = #tpu.pipeline_mode<synchronous>, transform_indices = @transform_2, window_bounds = array<i64: 1, 32>}, {pipeline_mode = #tpu.pipeline_mode<synchronous>, transform_indices = @transform_3, window_bounds = array<i64: 1, 32>}, {pipeline_mode = #tpu.pipeline_mode<synchronous>, transform_indices = @transform_4, window_bounds = array<i64: 1, 32>}]} {
    %c0_i32 = arith.constant 0 : i32
    %0 = arith.cmpi eq, %arg0, %c0_i32 : i32
    %1 = arith.extui %0 : i1 to i32
    %c0_i32_0 = arith.constant 0 : i32
    %2 = arith.cmpi ne, %1, %c0_i32_0 : i32
    scf.if %2 {
      %cst_20 = arith.constant 0.000000e+00 : f32
      %52 = vector.broadcast %cst_20 : f32 to vector<1x32xf32>
      %c0_21 = arith.constant 0 : index
      %c0_22 = arith.constant 0 : index
      %53 = vector.load %arg6[%c0_21, %c0_22] : memref<1x32xf32, #tpu.memory_space<vmem>>, vector<1x32xf32>
      tpu.vector_store %arg6[%c0_21, %c0_22], %52 {strides = array<i32>} : memref<1x32xf32, #tpu.memory_space<vmem>>, vector<1x32xf32>,
      %cst_23 = arith.constant 0.000000e+00 : f32
      %54 = vector.broadcast %cst_23 : f32 to vector<1x32xf32>
      %c0_24 = arith.constant 0 : index
      %c0_25 = arith.constant 0 : index
      %55 = vector.load %arg7[%c0_24, %c0_25] : memref<1x32xf32, #tpu.memory_space<vmem>>, vector<1x32xf32>
      tpu.vector_store %arg7[%c0_24, %c0_25], %54 {strides = array<i32>} : memref<1x32xf32, #tpu.memory_space<vmem>>, vector<1x32xf32>,
    } else {
    }
    %c16_i32 = arith.constant 16 : i32
    %3 = arith.muli %arg0, %c16_i32 : i32
    %4 = tpu.iota {dimensions = array<i32: 0>} : vector<16x1xi32>
    %5 = vector.broadcast %3 : i32 to vector<16x1xi32>
    %6 = arith.addi %4, %5 : vector<16x1xi32>
    %c16_i32_1 = arith.constant 16 : i32
    %7 = vector.broadcast %c16_i32_1 : i32 to vector<16x1xi32>
    %8 = arith.cmpi slt, %6, %7 : vector<16x1xi32>
    %c0 = arith.constant 0 : index
    %c0_2 = arith.constant 0 : index
    %9 = vector.load %arg1[%c0, %c0_2] : memref<16x32xf32, #tpu.memory_space<vmem>>, vector<16x32xf32>
    %cst = arith.constant 0.000000e+00 : f32
    %10 = vector.shape_cast %8 : vector<16x1xi1> to vector<16x1xi1>
    %11 = vector.broadcast %10 : vector<16x1xi1> to vector<16x32xi1>
    %12 = vector.broadcast %cst : f32 to vector<16x32xf32>
    %13 = arith.select %11, %9, %12 : vector<16x32xi1>, vector<16x32xf32>
    %c16_i32_3 = arith.constant 16 : i32
    %14 = arith.subi %c16_i32_3, %3 : i32
    %c16_i32_4 = arith.constant 16 : i32
    %15 = arith.minsi %14, %c16_i32_4 : i32
    %16 = arith.sitofp %15 : i32 to f32
    %17 = arith.sitofp %3 : i32 to f32
    %18 = arith.addf %17, %16 : f32
    %cst_5 = arith.constant dense<0.000000e+00> : vector<32xf32>
    %19 = vector.multi_reduction <add>, %13, %cst_5 [0] : vector<16x32xf32> to vector<32xf32>
    %20 = vector.shape_cast %19 : vector<32xf32> to vector<1x32xf32>
    %21 = vector.broadcast %16 : f32 to vector<1x32xf32>
    %22 = arith.divf %20, %21 : vector<1x32xf32>
    %23 = vector.broadcast %22 : vector<1x32xf32> to vector<16x32xf32>
    %24 = arith.subf %13, %23 : vector<16x32xf32>
    %cst_6 = arith.constant 0.000000e+00 : f32
    %25 = vector.shape_cast %8 : vector<16x1xi1> to vector<16x1xi1>
    %26 = vector.broadcast %25 : vector<16x1xi1> to vector<16x32xi1>
    %27 = vector.broadcast %cst_6 : f32 to vector<16x32xf32>
    %28 = arith.select %26, %24, %27 : vector<16x32xi1>, vector<16x32xf32>
    %29 = arith.mulf %28, %28 : vector<16x32xf32>
    %cst_7 = arith.constant dense<0.000000e+00> : vector<32xf32>
    %30 = vector.multi_reduction <add>, %29, %cst_7 [0] : vector<16x32xf32> to vector<32xf32>
    %31 = vector.shape_cast %30 : vector<32xf32> to vector<1x32xf32>
    %c0_8 = arith.constant 0 : index
    %c0_9 = arith.constant 0 : index
    %32 = vector.load %arg6[%c0_8, %c0_9] : memref<1x32xf32, #tpu.memory_space<vmem>>, vector<1x32xf32>
    %33 = arith.subf %22, %32 : vector<1x32xf32>
    %c0_10 = arith.constant 0 : index
    %c0_11 = arith.constant 0 : index
    %34 = vector.load %arg6[%c0_10, %c0_11] : memref<1x32xf32, #tpu.memory_space<vmem>>, vector<1x32xf32>
    %35 = arith.divf %16, %18 : f32
    %36 = vector.broadcast %35 : f32 to vector<1x32xf32>
    %37 = arith.mulf %33, %36 : vector<1x32xf32>
    %38 = arith.addf %34, %37 : vector<1x32xf32>
    %c0_12 = arith.constant 0 : index
    %c0_13 = arith.constant 0 : index
    %39 = vector.load %arg6[%c0_12, %c0_13] : memref<1x32xf32, #tpu.memory_space<vmem>>, vector<1x32xf32>
    tpu.vector_store %arg6[%c0_12, %c0_13], %38 {strides = array<i32>} : memref<1x32xf32, #tpu.memory_space<vmem>>, vector<1x32xf32>,
    %c0_14 = arith.constant 0 : index
    %c0_15 = arith.constant 0 : index
    %40 = vector.load %arg7[%c0_14, %c0_15] : memref<1x32xf32, #tpu.memory_space<vmem>>, vector<1x32xf32>
    %41 = arith.addf %40, %31 : vector<1x32xf32>
    %42 = arith.mulf %33, %33 : vector<1x32xf32>
    %43 = arith.mulf %17, %16 : f32
    %44 = arith.divf %43, %18 : f32
    %45 = vector.broadcast %44 : f32 to vector<1x32xf32>
    %46 = arith.mulf %42, %45 : vector<1x32xf32>
    %47 = arith.addf %41, %46 : vector<1x32xf32>
    %c0_16 = arith.constant 0 : index
    %c0_17 = arith.constant 0 : index
    %48 = vector.load %arg7[%c0_16, %c0_17] : memref<1x32xf32, #tpu.memory_space<vmem>>, vector<1x32xf32>
    tpu.vector_store %arg7[%c0_16, %c0_17], %47 {strides = array<i32>} : memref<1x32xf32, #tpu.memory_space<vmem>>, vector<1x32xf32>,
    %c0_i32_18 = arith.constant 0 : i32
    %49 = arith.cmpi eq, %arg0, %c0_i32_18 : i32
    %50 = arith.extui %49 : i1 to i32
    %c0_i32_19 = arith.constant 0 : i32
    %51 = arith.cmpi ne, %50, %c0_i32_19 : i32
    scf.if %51 {
      %c0_20 = arith.constant 0 : index
      %c0_21 = arith.constant 0 : index
      %52 = vector.load %arg7[%c0_20, %c0_21] : memref<1x32xf32, #tpu.memory_space<vmem>>, vector<1x32xf32>
      %cst_22 = arith.constant 6.250000e-02 : f32
      %53 = vector.broadcast %cst_22 : f32 to vector<1x32xf32>
      %54 = arith.mulf %52, %53 : vector<1x32xf32>
      %cst_23 = arith.constant 9.99999974E-6 : f32
      %55 = vector.broadcast %cst_23 : f32 to vector<1x32xf32>
      %56 = arith.addf %54, %55 : vector<1x32xf32>
      %57 = math.rsqrt %56 : vector<1x32xf32>
      %c0_24 = arith.constant 0 : index
      %c0_25 = arith.constant 0 : index
      %58 = vector.load %arg2[%c0_24, %c0_25] : memref<1x32xf32, #tpu.memory_space<vmem>>, vector<1x32xf32>
      %59 = arith.mulf %58, %57 : vector<1x32xf32>
      %c0_26 = arith.constant 0 : index
      %c0_27 = arith.constant 0 : index
      %60 = vector.load %arg4[%c0_26, %c0_27] : memref<1x32xf32, #tpu.memory_space<vmem>>, vector<1x32xf32>
      tpu.vector_store %arg4[%c0_26, %c0_27], %59 {strides = array<i32>} : memref<1x32xf32, #tpu.memory_space<vmem>>, vector<1x32xf32>,
      %c0_28 = arith.constant 0 : index
      %c0_29 = arith.constant 0 : index
      %61 = vector.load %arg3[%c0_28, %c0_29] : memref<1x32xf32, #tpu.memory_space<vmem>>, vector<1x32xf32>
      %c0_30 = arith.constant 0 : index
      %c0_31 = arith.constant 0 : index
      %62 = vector.load %arg6[%c0_30, %c0_31] : memref<1x32xf32, #tpu.memory_space<vmem>>, vector<1x32xf32>
      %63 = arith.mulf %62, %59 : vector<1x32xf32>
      %64 = arith.subf %61, %63 : vector<1x32xf32>
      %c0_32 = arith.constant 0 : index
      %c0_33 = arith.constant 0 : index
      %65 = vector.load %arg5[%c0_32, %c0_33] : memref<1x32xf32, #tpu.memory_space<vmem>>, vector<1x32xf32>
      tpu.vector_store %arg5[%c0_32, %c0_33], %64 {strides = array<i32>} : memref<1x32xf32, #tpu.memory_space<vmem>>, vector<1x32xf32>,
    } else {
    }
    return
  }
  func.func @transform_0(%arg0: i32) -> (i32, i32) {
    %c0_i32 = arith.constant 0 : i32
    %c0_i32_0 = arith.constant 0 : i32
    return %arg0, %c0_i32 : i32, i32
  }
  func.func @transform_1(%arg0: i32) -> (i32, i32) {
    %c0_i32 = arith.constant 0 : i32
    %c0_i32_0 = arith.constant 0 : i32
    %c0_i32_1 = arith.constant 0 : i32
    return %c0_i32, %c0_i32_0 : i32, i32
  }
  func.func @transform_2(%arg0: i32) -> (i32, i32) {
    %c0_i32 = arith.constant 0 : i32
    %c0_i32_0 = arith.constant 0 : i32
    %c0_i32_1 = arith.constant 0 : i32
    return %c0_i32, %c0_i32_0 : i32, i32
  }
  func.func @transform_3(%arg0: i32) -> (i32, i32) {
    %c0_i32 = arith.constant 0 : i32
    %c0_i32_0 = arith.constant 0 : i32
    %c0_i32_1 = arith.constant 0 : i32
    return %c0_i32, %c0_i32_0 : i32, i32
  }
  func.func @transform_4(%arg0: i32) -> (i32, i32) {
    %c0_i32 = arith.constant 0 : i32
    %c0_i32_0 = arith.constant 0 : i32
    %c0_i32_1 = arith.constant 0 : i32
    return %c0_i32, %c0_i32_0 : i32, i32
  }
}

</mosaic_0001>

<llo_original>
// kernel: tpu_custom_call.1
$region0: #{tpu_custom_call.1}
  #allocation0 [shape = 'u32[]', space=smem, size = 0x4, offset = 0x4, fixed_abs, tag = 'smem constant byte address 0x4 - core index']
  #allocation1 [shape = 'u32[72,128]{1,0:T(1,128)}', space=vmem, size = 0x9000, scoped, tag = 'internal scratch']
  #allocation2 [shape = 'f32[1,32]{1,0:T(1,128)}', space=vmem, size = 0x200, scoped, tag = 'scratch operand']
  #allocation3 [shape = 'f32[1,32]{1,0:T(1,128)}', space=vmem, size = 0x200, scoped, tag = 'scratch operand']
  %s0 = inlined_call_operand.hbm [shape: f32[16,32], index: 0, kind: input, shape index: {}]
  %s1 = inlined_call_operand.hbm [shape: f32[1,32], index: 1, kind: input, shape index: {}]
  %s2 = inlined_call_operand.vmem [shape: f32[1,32], index: 2, kind: input, shape index: {}]
  %s3 = inlined_call_operand.hbm [shape: f32[1,32], index: 3, kind: output, shape index: {0}]
  %s4 = inlined_call_operand.hbm [shape: f32[1,32], index: 4, kind: output, shape index: {1}]
  %5 = xla_tuple %s3, %s4
  %s6 = sld [smem:[#allocation0]]
  $region46: #{tpu_custom_call.1} parent=0
    _
  %s8 = ssub.s32 1, %s6
  %s9 = scalar_select 0, %s8, %s6
  $region1: #{tpu_custom_call.1} parent=0
    #allocation4 [shape = 'u8[8192]{0}', space=vmem, size = 0x2000, scoped, tag = 'input window, operand 0, single buffered']
    #allocation5 [shape = 's32[1]{0}', space=sflag, size = 0x4, scoped, tag = 'scoped memory for tpu_custom_call.1']
    #allocation6 [shape = 's32[1]{0}', space=sflag, size = 0x4, scoped, tag = 'scoped memory for tpu_custom_call.1']
    #allocation7 [shape = 'u8[512]{0}', space=vmem, size = 0x400, scoped, tag = 'input window, operand 1, single buffered']
    #allocation8 [shape = 's32[1]{0}', space=sflag, size = 0x4, scoped, tag = 'scoped memory for tpu_custom_call.1']
    #allocation9 [shape = 'u8[512]{0}', space=vmem, size = 0x400, scoped, tag = 'output window, operand 0, single buffered']
    #allocation10 [shape = 'u8[512]{0}', space=vmem, size = 0x400, scoped, tag = 'output window, operand 1, single buffered']
    #allocation11 [shape = 's32[1]{0}', space=sflag, size = 0x4, scoped, tag = 'scoped memory for tpu_custom_call.1']
    %10 = vsyncpa [#allocation5], 0
    %11 = vsyncpa [#allocation8], 0
    %12 = vsyncpa [#allocation6], 0
    %13 = vsyncpa [#allocation11], 0
    // Predicated region
    $region2: #{tpu_custom_call.1} parent=1 // pred_check
      _
    $region3: #{tpu_custom_call.1} parent=1 // pred_check_branch
      %15 = sbr.rel (0) target = $region5
    $region4: #{tpu_custom_call.1} parent=1 // pred_region
      %17 = vsyncadd [#allocation5], 0
      %s18 = sshll.u32 %s0, 4
      %s19 = int_to_ptr.hbm [resolvable:$true] %s18
      %s20 = sshll.u32 [#allocation4], 4
      %s21 = int_to_ptr.vmem [resolvable:$true] %s20
      %26 = dma.hbm_to_vmem [thread:$0]  %s19, 256, %s21, [#allocation5], 128, 128, 8
    $region5: #{tpu_custom_call.1} parent=1 // pred_fallthru
      _
    // Predicated region
    $region6: #{tpu_custom_call.1} parent=1 // pred_check
      _
    $region7: #{tpu_custom_call.1} parent=1 // pred_check_branch
      %28 = sbr.rel (0) target = $region9
    $region8: #{tpu_custom_call.1} parent=1 // pred_region
      %30 = vsyncadd [#allocation8], 0
      %s32 = sshll.u32 %s1, 4
      %s33 = int_to_ptr.hbm [resolvable:$true] %s32
      %s34 = sshll.u32 [#allocation7], 4
      %s35 = int_to_ptr.vmem [resolvable:$true] %s34
      %37 = dma.hbm_to_vmem [thread:$0]  %s33, 16, %s35, [#allocation8]
    $region9: #{tpu_custom_call.1} parent=1 // pred_fallthru
      _
    // Predicated region
    $region10: #{tpu_custom_call.1} parent=1 // pred_check
      _
    $region11: #{tpu_custom_call.1} parent=1 // pred_check_branch
      %39 = sbr.rel (0) target = $region13
    $region12: #{tpu_custom_call.1} parent=1 // pred_region
      _
    $region13: #{tpu_custom_call.1} parent=1 // pred_fallthru
      _
    // Predicated region
    $region14: #{tpu_custom_call.1} parent=1 // pred_check
      _
    $region15: #{tpu_custom_call.1} parent=1 // pred_check_branch
      %41 = sbr.rel (0) target = $region17
    $region16: #{tpu_custom_call.1} parent=1 // pred_region
      %43 = dma.done [#allocation5], 256
    $region17: #{tpu_custom_call.1} parent=1 // pred_fallthru
      _
    // Predicated region
    $region18: #{tpu_custom_call.1} parent=1 // pred_check
      _
    $region19: #{tpu_custom_call.1} parent=1 // pred_check_branch
      %45 = sbr.rel (0) target = $region21
    $region20: #{tpu_custom_call.1} parent=1 // pred_region
      %47 = dma.done [#allocation8], 16
    $region21: #{tpu_custom_call.1} parent=1 // pred_fallthru
      _
    %p48 = scmp.eq.s32.totalorder 0, 0
    // Predicated region
    $region22: #{tpu_custom_call.1} parent=1 // pred_check
      %p49 = pneg %p48
    $region23: #{tpu_custom_call.1} parent=1 // pred_check_branch
      %51 = sbr.rel (%p49) target = $region25
    $region24: #{tpu_custom_call.1} parent=1 // pred_region
      %vm52 = vcmask 253952
      %53 = vst.msk [vmem:[#allocation2] sm:$0x1] %vm52, 0.0
      %54 = vst.msk [vmem:[#allocation3] sm:$0x1] %vm52, 0.0
    $region25: #{tpu_custom_call.1} parent=1 // pred_fallthru
      _
    %s55 = smul.u32 0, 16
    %v56 = vlaneseq
    %v57 = vshrl.u32 %v56, 7
    %v58 = vadd.s32 %v57, 8
    %v59 = vstv %s55
    %v60 = vadd.s32 %v57, %v59
    %v61 = vadd.s32 %v58, %v59
    %vm62 = vcmp.lt.s32.totalorder %v60, 16
    %vm63 = vcmp.lt.s32.totalorder %v61, 16
    %v64 = vld [vmem:[#allocation4] sm:$0xff]
    %v65 = vld [vmem:[#allocation4 + $0x8] sm:$0xff]
    %v66 = vsel %vm62, 1, 0
    %v67 = vsel %vm63, 1, 0
    %vm68 = vcmp.eq.s32.totalorder %v66, 1
    %vm69 = vcmp.eq.s32.totalorder %v67, 1
    %v70 = vsel %vm68, %v64, 0.0
    %v71 = vsel %vm69, %v65, 0.0
    %s72 = ssub.s32 16, %s55
    %p73 = scmp.lt.s32.totalorder %s72, 16
    %s74 = scalar_select %p73, %s72, 16
    %s75 = scvt.s32.f32 %s74
    %s76 = scvt.s32.f32 %s55
    %s77 = sadd.f32 %s76, %s75
    %vm78 = vcmask 261120
    %v79 = vsel %vm78, %v70, 0.0
    %v80 = vsel %vm78, %v71, 0.0
    %v81 = vadd.f32 %v79, %v80
    %v82 = vrot.slane %v81, 4
    %v83 = vadd.f32 %v81, %v82
    %v84 = vrot.slane %v83, 2
    %v85 = vadd.f32 %v83, %v84
    %v86 = vrot.slane %v85, 1
    %v87 = vadd.f32 %v85, %v86
    %v88 = vstv %s75
    %v89 = vrcp.pop %v88
    %v90 = vmul.f32 %v88, %v89
    %v91 = vsub.f32 1.0, %v90
    %v92 = vmul.f32 %v89, %v91
    %v93 = vadd.f32 %v89, %v92
    %vm94 = vweird.f32 %v88
    %vm95 = vweird.f32 %v89
    %vm96 = vmor %vm94, %vm95
    %v97 = vsel %vm96, %v89, %v93
    %v98 = vand.u32 2147483647, %v88
    %vm99 = vcmp.eq.f32.partialorder %v98, 8.507059e+37
    %v100 = vand.u32 %v88, 2147483648
    %v101 = vor.u32 1.1754944e-38, %v100
    %v102 = vsel %vm99, %v101, %v97
    %v103 = vmul.f32 %v87, %v102
    %v104 = vsub.f32 %v70, %v103
    %v105 = vsub.f32 %v71, %v103
    %v106 = vsel %vm68, %v104, 0.0
    %v107 = vsel %vm69, %v105, 0.0
    %v108 = vmul.f32 %v106, %v106
    %v109 = vmul.f32 %v107, %v107
    %v110 = vsel %vm78, %v108, 0.0
    %v111 = vsel %vm78, %v109, 0.0
    %v112 = vadd.f32 %v110, %v111
    %v113 = vrot.slane %v112, 4
    %v114 = vadd.f32 %v112, %v113
    %v115 = vrot.slane %v114, 2
    %v116 = vadd.f32 %v114, %v115
    %v117 = vrot.slane %v116, 1
    %v118 = vadd.f32 %v116, %v117
    %v119 = vld [vmem:[#allocation2] sm:$0x1]
    %v120 = vsub.f32 %v103, %v119
    %v121 = vstv %s77
    %v122 = vrcp.pop %v121
    %v123 = vmul.f32 %v121, %v122
    %v124 = vsub.f32 1.0, %v123
    %v125 = vmul.f32 %v122, %v124
    %v126 = vadd.f32 %v122, %v125
    %vm127 = vweird.f32 %v121
    %vm128 = vweird.f32 %v122
    %vm129 = vmor %vm127, %vm128
    %v130 = vsel %vm129, %v122, %v126
    %v131 = vand.u32 2147483647, %v121
    %vm132 = vcmp.eq.f32.partialorder %v131, 8.507059e+37
    %v133 = vand.u32 %v121, 2147483648
    %v134 = vor.u32 1.1754944e-38, %v133
    %v135 = vsel %vm132, %v134, %v130
    %s136 = vtos %v135
    %s137 = smul.f32 %s75, %s136
    %v138 = vstv %s137
    %v139 = vmul.f32 %v120, %v138
    %v140 = vadd.f32 %v119, %v139
    %vm141 = vcmask 253952
    %142 = vst.msk [vmem:[#allocation2] sm:$0x1] %vm141, %v140
    %v143 = vld [vmem:[#allocation3] sm:$0x1]
    %v144 = vadd.f32 %v143, %v118
    %v145 = vmul.f32 %v120, %v120
    %s146 = smul.f32 %s76, %s75
    %v147 = vstv %s77
    %v148 = vrcp.pop %v147
    %v149 = vmul.f32 %v147, %v148
    %v150 = vsub.f32 1.0, %v149
    %v151 = vmul.f32 %v148, %v150
    %v152 = vadd.f32 %v148, %v151
    %vm153 = vweird.f32 %v147
    %vm154 = vweird.f32 %v148
    %vm155 = vmor %vm153, %vm154
    %v156 = vsel %vm155, %v148, %v152
    %v157 = vand.u32 2147483647, %v147
    %vm158 = vcmp.eq.f32.partialorder %v157, 8.507059e+37
    %v159 = vand.u32 %v147, 2147483648
    %v160 = vor.u32 1.1754944e-38, %v159
    %v161 = vsel %vm158, %v160, %v156
    %s162 = vtos %v161
    %s163 = smul.f32 %s146, %s162
    %v164 = vstv %s163
    %v165 = vmul.f32 %v145, %v164
    %v166 = vadd.f32 %v144, %v165
    %167 = vst.msk [vmem:[#allocation3] sm:$0x1] %vm141, %v166
    // Predicated region
    $region26: #{tpu_custom_call.1} parent=1 // pred_check
      %p168 = pneg %p48
    $region27: #{tpu_custom_call.1} parent=1 // pred_check_branch
      %170 = sbr.rel (%p168) target = $region29
    $region28: #{tpu_custom_call.1} parent=1 // pred_region
      %v171 = vld [vmem:[#allocation3] sm:$0x1]
      %v172 = vmul.f32 %v171, 0.0625
      %v173 = vadd.f32 %v172, 1e-05
      %v174 = vrsqrt.pop %v173
      %v175 = vmul.f32 %v174, %v173
      %v176 = vmul.f32 %v175, %v174
      %v177 = vmul.f32 0.5, %v176
      %v178 = vsub.f32 1.5, %v177
      %v179 = vmul.f32 %v174, %v178
      %vm180 = vweird.f32 %v173
      %vm181 = vweird.f32 %v174
      %vm182 = vmor %vm180, %vm181
      %v183 = vsel %vm182, %v174, %v179
      %v184 = vld [vmem:[#allocation7] sm:$0x1]
      %v185 = vmul.f32 %v184, %v183
      %186 = vst.msk [vmem:[#allocation9] sm:$0x1] %vm141, %v185
      %v187 = vld [vmem:[%s2] sm:$0x1]
      %v188 = vld [vmem:[#allocation2] sm:$0x1]
      %v189 = vmul.f32 %v188, %v185
      %v190 = vsub.f32 %v187, %v189
      %191 = vst.msk [vmem:[#allocation10] sm:$0x1] %vm141, %v190
    $region29: #{tpu_custom_call.1} parent=1 // pred_fallthru
      _
    // Predicated region
    $region30: #{tpu_custom_call.1} parent=1 // pred_check
      _
    $region31: #{tpu_custom_call.1} parent=1 // pred_check_branch
      %193 = sbr.rel (0) target = $region33
    $region32: #{tpu_custom_call.1} parent=1 // pred_region
      %195 = vsyncadd [#allocation6], 0
      %s197 = sshll.u32 [#allocation9], 4
      %s198 = int_to_ptr.vmem [resolvable:$true] %s197
      %s199 = sshll.u32 %s3, 4
      %s200 = int_to_ptr.hbm [resolvable:$true] %s199
      %202 = dma.vmem_to_hbm [thread:$0]  %s198, 16, %s200, [#allocation6]
    $region33: #{tpu_custom_call.1} parent=1 // pred_fallthru
      _
    // Predicated region
    $region34: #{tpu_custom_call.1} parent=1 // pred_check
      _
    $region35: #{tpu_custom_call.1} parent=1 // pred_check_branch
      %204 = sbr.rel (0) target = $region37
    $region36: #{tpu_custom_call.1} parent=1 // pred_region
      %206 = vsyncadd [#allocation11], 0
      %s208 = sshll.u32 [#allocation10], 4
      %s209 = int_to_ptr.vmem [resolvable:$true] %s208
      %s210 = sshll.u32 %s4, 4
      %s211 = int_to_ptr.hbm [resolvable:$true] %s210
      %213 = dma.vmem_to_hbm [thread:$0]  %s209, 16, %s211, [#allocation11]
    $region37: #{tpu_custom_call.1} parent=1 // pred_fallthru
      _
    // Predicated region
    $region38: #{tpu_custom_call.1} parent=1 // pred_check
      _
    $region39: #{tpu_custom_call.1} parent=1 // pred_check_branch
      %215 = sbr.rel (0) target = $region41
    $region40: #{tpu_custom_call.1} parent=1 // pred_region
      %217 = dma.done [#allocation6], 16
    $region41: #{tpu_custom_call.1} parent=1 // pred_fallthru
      _
    // Predicated region
    $region42: #{tpu_custom_call.1} parent=1 // pred_check
      _
    $region43: #{tpu_custom_call.1} parent=1 // pred_check_branch
      %219 = sbr.rel (0) target = $region45
    $region44: #{tpu_custom_call.1} parent=1 // pred_region
      %221 = dma.done [#allocation11], 16
    $region45: #{tpu_custom_call.1} parent=1 // pred_fallthru
      _
    %222 = vsyncpa [#allocation5], 1
    %223 = vsyncpa [#allocation8], 1
    %224 = vsyncpa [#allocation6], 1
    %225 = vsyncpa [#allocation11], 1

</llo_original>
